<compile_context>
chip_gen: v6e
topology: v6e:2x2x1
jax: 0.10.0
libtpu: 0.0.40
codegen_flags: <defaults>
</compile_context>

<pallas_src>
import functools
import math

import jax
import jax.numpy as jnp
from jax.experimental import pallas as pl
from jax.experimental.pallas import tpu as pltpu

_LANE = 128


def _round_up(n, m):
    return ((n + m - 1) // m) * m


def _cdiv(a, b):
    return (a + b - 1) // b


@functools.lru_cache(maxsize=None)
def _chip_config():
    """Pick per-buffer tile budget / VMEM limit / row-split policy per chip."""
    vmem_bytes = None
    try:
        info = pltpu.get_tpu_info()
        vmem_bytes = int(getattr(info, "vmem_capacity_bytes", 0)) or None
    except Exception:
        vmem_bytes = None
    if vmem_bytes is None:
        vmem_bytes = 64 * 1024 * 1024  # conservative default (v7x-sized VMEM)

    if vmem_bytes <= 64 * 1024 * 1024:
        # v7x-class: 64 MiB VMEM per TensorCore, 2 TCs, very high HBM BW.
        # Bigger tiles amortize the ~0.35 us per-grid-step overhead; keep the
        # 2-way row split so both TCs can be given work.
        return {
            "per_buffer": 10 * 1024 * 1024,   # 2x(in+out) double-buffered ~40 MiB
            "vmem_limit": 48 * 1024 * 1024,
            "split_rows": True,
        }
    # v5e / v6e: 128 MiB VMEM, single TensorCore -> no forced row split.
    return {
        "per_buffer": 12 * 1024 * 1024,       # 2x(in+out) double-buffered ~48 MiB
        "vmem_limit": 64 * 1024 * 1024,
        "split_rows": False,
    }


def _swish_kernel(beta_ref, x_ref, o_ref):
    # beta_ref: (1, TN) f32 in VMEM; x_ref / o_ref: (TM, TN) tiles in VMEM.
    x = x_ref[...].astype(jnp.float32)
    b = beta_ref[...]                      # broadcasts (1, TN) -> (TM, TN)
    o_ref[...] = (x * jax.nn.sigmoid(b * x)).astype(o_ref.dtype)


def _swish_pallas(x2, beta_row):
    """Core tiled pallas_call on a 2-D view x2:(R, W) with beta_row:(1, W)."""
    R, W = x2.shape
    itemsize = jnp.dtype(x2.dtype).itemsize
    sub = max(8, 32 // itemsize)           # sublane multiple: 8 f32, 16 bf16, 32 i8
    cfg = _chip_config()
    per_buffer = cfg["per_buffer"]

    # --- column tile: prefer full-width contiguous tiles ----------------------
    if W % _LANE == 0:
        if sub * W * itemsize <= per_buffer:
            tn = W                         # full width: one contiguous DMA per block
        else:
            # Lane split needed: largest multiple-of-128 divisor of W that fits.
            cap = max(_LANE, (per_buffer // (sub * itemsize)) // _LANE * _LANE)
            tn = None
            for d in range(cap, 0, -_LANE):
                if W % d == 0:
                    tn = d
                    break
            if tn is None:
                tn = cap                   # no divisor found; accept one edge block
    else:
        tn = W                             # block equals the full array dim

    # --- row tile from the VMEM budget ----------------------------------------
    tm_budget = max(sub, (per_buffer // (tn * itemsize)) // sub * sub)
    tm_cap = _round_up(max(R, 1), sub)
    if cfg["split_rows"] and R > 2 * sub:
        # Ensure >= 2 row blocks only where a second TensorCore exists (v7x).
        tm_cap = _round_up(_cdiv(R, 2), sub)
    tm = max(sub, min(tm_budget, tm_cap))

    n_col = _cdiv(W, tn)
    n_row = _cdiv(R, tm)
    # Rows innermost -> beta's block index is constant across the inner axis,
    # so its (1, tn) block stays resident instead of being re-fetched each step.
    grid = (n_col, n_row)

    return pl.pallas_call(
        _swish_kernel,
        out_shape=jax.ShapeDtypeStruct((R, W), x2.dtype),
        grid_spec=pltpu.PrefetchScalarGridSpec(
            num_scalar_prefetch=0,
            grid=grid,
            in_specs=[
                pl.BlockSpec((1, tn), lambda j, i: (0, j)),    # beta row
                pl.BlockSpec((tm, tn), lambda j, i: (i, j)),   # x tile
            ],
            out_specs=pl.BlockSpec((tm, tn), lambda j, i: (i, j)),
        ),
        compiler_params=pltpu.CompilerParams(
            dimension_semantics=("parallel", "parallel"),
            vmem_limit_bytes=cfg["vmem_limit"],
        ),
        cost_estimate=pl.CostEstimate(
            flops=2 * R * W,
            transcendentals=R * W,
            bytes_accessed=2 * R * W * itemsize + W * 4,
        ),
    )(beta_row, x2)


@jax.jit
def swish(x, beta):
    """x: (..., D); beta: (D,) or (1,) (scalar case of the PyTorch module)."""
    orig_shape = x.shape
    D = orig_shape[-1]
    M = 1
    for s in orig_shape[:-1]:
        M *= s

    beta_vec = jnp.broadcast_to(beta.reshape(-1), (D,)).astype(jnp.float32)
    xm = x.reshape(M, D)

    # Smallest k with (k*D) % 128 == 0: fold k consecutive rows together so the
    # kernel's last dim is lane-dense (unmasked full-lane vector stores).
    k0 = _LANE // math.gcd(D, _LANE)

    if k0 == 1:
        # D already a multiple of 128: no repack needed.
        out = _swish_pallas(xm, beta_vec.reshape(1, D))
    else:
        W = k0 * D
        beta_row = jnp.tile(beta_vec, k0).reshape(1, W)
        M_main = (M // k0) * k0
        if M_main == M:
            # Clean repack: free row-major reshape.
            out = _swish_pallas(xm.reshape(M // k0, W), beta_row).reshape(M, D)
        elif M_main > 0:
            # Ragged M: keep the bulk on the lane-dense path, handle the
            # <= k0-1 leftover rows in plain JAX, then stitch back together.
            x_main = jax.lax.slice_in_dim(xm, 0, M_main, axis=0)
            y_main = _swish_pallas(
                x_main.reshape(M_main // k0, W), beta_row
            ).reshape(M_main, D)
            x_tail = jax.lax.slice_in_dim(xm, M_main, M, axis=0).astype(jnp.float32)
            y_tail = (x_tail * jax.nn.sigmoid(beta_vec[None, :] * x_tail)).astype(x.dtype)
            out = jnp.concatenate([y_main, y_tail], axis=0)
        else:
            # Fewer rows than the repack factor: tiny array, non-repacked path
            # (block last dim equals the full array dim -> still legal).
            out = _swish_pallas(xm, beta_vec.reshape(1, D))

    return out.reshape(orig_shape)


def swish_ref(x, beta):
    # Pure-JAX reference mirroring the PyTorch forward.
    if x.ndim == 2:
        return x * jax.nn.sigmoid(beta[None, :] * x)
    else:
        return x * jax.nn.sigmoid(beta[None, None, :] * x)


if __name__ == "__main__":
    key = jax.random.PRNGKey(0)
    k1, k2, k3, k4 = jax.random.split(key, 4)

    D = 32

    # Case 1: dim > 0 -> learnable beta of shape (D,).
    beta = jnp.ones((D,), jnp.float32) + 0.1 * jax.random.normal(k3, (D,))

    # 2-D input (batch, hidden) -> lane-dense repack path (4 rows folded, W=128).
    x2d = jax.random.normal(k1, (8, D), jnp.float32)
    y2d = jax.block_until_ready(swish(x2d, beta))
    assert jnp.allclose(y2d, swish_ref(x2d, beta), atol=1e-5, rtol=1e-5)

    # 3-D input (batch, seq, hidden).
    x3d = jax.random.normal(k2, (2, 8, D), jnp.float32)
    y3d = jax.block_until_ready(swish(x3d, beta))
    assert jnp.allclose(y3d, swish_ref(x3d, beta), atol=1e-5, rtol=1e-5)

    # Case 2: dim <= 0 -> fixed scalar beta = ones((1,)), broadcast over D.
    beta_scalar = jnp.ones((1,), jnp.float32)
    y2d_s = jax.block_until_ready(swish(x2d, beta_scalar))
    assert jnp.allclose(y2d_s, x2d * jax.nn.sigmoid(1.0 * x2d),
                        atol=1e-5, rtol=1e-5)

    # Ragged row count (M % repack-factor != 0): bulk rows stay lane-dense in
    # Pallas, only the tail rows are handled outside the kernel.
    x_ragged = jax.random.normal(k4, (7, D), jnp.float32)
    y_ragged = jax.block_until_ready(swish(x_ragged, beta))
    assert jnp.allclose(y_ragged, swish_ref(x_ragged, beta),
                        atol=1e-5, rtol=1e-5)

    # D already a multiple of 128 -> direct full-width path, no repack.
    D2 = 256
    beta2 = jnp.ones((D2,), jnp.float32) + 0.05 * jax.random.normal(k3, (D2,))
    x_big = jax.random.normal(k1, (16, D2), jnp.float32)
    y_big = jax.block_until_ready(swish(x_big, beta2))
    assert jnp.allclose(y_big, swish_ref(x_big, beta2), atol=1e-5, rtol=1e-5)

    print("KERNEL_OK")
</pallas_src>

<mosaic_0001>
module attributes {stable_mosaic.version = 11 : i64} {
  func.func @_swish_kernel(%arg0: i32, %arg1: i32, %arg2: memref<1x128xf32, #tpu.memory_space<vmem>>, %arg3: memref<8x128xf32, #tpu.memory_space<vmem>>, %arg4: memref<8x128xf32, #tpu.memory_space<vmem>>) attributes {dimension_semantics = [#tpu.dimension_semantics<parallel>, #tpu.dimension_semantics<parallel>], iteration_bounds = array<i64: 1, 1>, scalar_prefetch = 0 : i64, scratch_operands = 0 : i64, tpu.core_type = #tpu.core_type<tc>, window_params = [{transform_indices = @transform_0, window_bounds = array<i64: 1, 128>}, {transform_indices = @transform_1, window_bounds = array<i64: 8, 128>}, {transform_indices = @transform_2, window_bounds = array<i64: 8, 128>}]} {
    %c0 = arith.constant 0 : index
    %c0_0 = arith.constant 0 : index
    %0 = vector.load %arg3[%c0, %c0_0] : memref<8x128xf32, #tpu.memory_space<vmem>>, vector<8x128xf32>
    %c0_1 = arith.constant 0 : index
    %c0_2 = arith.constant 0 : index
    %1 = vector.load %arg2[%c0_1, %c0_2] : memref<1x128xf32, #tpu.memory_space<vmem>>, vector<1x128xf32>
    %2 = vector.broadcast %1 : vector<1x128xf32> to vector<8x128xf32>
    %3 = arith.mulf %2, %0 : vector<8x128xf32>
    %4 = arith.negf %3 : vector<8x128xf32>
    %5 = math.exp %4 : vector<8x128xf32>
    %cst = arith.constant 1.000000e+00 : f32
    %6 = vector.broadcast %cst : f32 to vector<8x128xf32>
    %7 = arith.addf %6, %5 : vector<8x128xf32>
    %8 = arith.divf %6, %7 : vector<8x128xf32>
    %9 = arith.mulf %0, %8 : vector<8x128xf32>
    %c0_3 = arith.constant 0 : index
    %c0_4 = arith.constant 0 : index
    %10 = vector.load %arg4[%c0_3, %c0_4] : memref<8x128xf32, #tpu.memory_space<vmem>>, vector<8x128xf32>
    tpu.vector_store %arg4[%c0_3, %c0_4], %9 {strides = array<i32>} : memref<8x128xf32, #tpu.memory_space<vmem>>, vector<8x128xf32>,
    return
  }
  func.func @transform_0(%arg0: i32, %arg1: i32) -> (i32, i32) {
    %c0_i32 = arith.constant 0 : i32
    %c0_i32_0 = arith.constant 0 : i32
    return %c0_i32, %arg0 : i32, i32
  }
  func.func @transform_1(%arg0: i32, %arg1: i32) -> (i32, i32) {
    %c0_i32 = arith.constant 0 : i32
    return %arg1, %arg0 : i32, i32
  }
  func.func @transform_2(%arg0: i32, %arg1: i32) -> (i32, i32) {
    %c0_i32 = arith.constant 0 : i32
    return %arg1, %arg0 : i32, i32
  }
}

</mosaic_0001>

<llo_original>
// kernel: tile.9
$region0: #{tile.9}
  %s0 = inlined_call_operand.vmem [shape: f32[4,32], index: 0, kind: input, shape index: {}]
  %s1 = inlined_call_operand.vmem [shape: f32[1,128], index: 1, kind: output, shape index: {}]
  $region1: #{tile.9} parent=0
    #allocation0 [shape = 'u8[4096]{0}', space=vmem, size = 0x1000, scoped, tag = 'scoped mem for output reshape']
    #allocation1 [shape = 'u8[4096]{0}', space=vmem, size = 0x1000, scoped, tag = 'scoped mem for input reshape']
    %s3 = sshll.u32 1, 4
    %s4 = ssub.s32 %s3, 1
    %v5 = vld [vmem:[%s0] sm:%s4]
    %6 = vst [vmem:[#allocation1] sm:%s4] %v5
    %v7 = vld [vmem:[#allocation1] sm:$0x1]
    %vm8 = vcmask 261120
    %9 = vst.msk [vmem:[#allocation0] sm:$0x1] %vm8, %v7
    %s10 = scalar_lea.vmem [#allocation1], 3
    %v11 = vld [vmem:[%s10] sm:$0x1]
    %12 = vrot.lane.b32.xlu0 %v11, 96
    %v13 = vpop.permute.xlu0 %12
    %vm14 = vcmask 1048320
    %15 = vst.msk [vmem:[#allocation0] sm:$0x1] %vm14, %v13
    %s16 = scalar_lea.vmem [#allocation1], 2
    %v17 = vld [vmem:[%s16] sm:$0x1]
    %18 = vrot.lane.b32.xlu0 %v17, 64
    %v19 = vpop.permute.xlu0 %18
    %vm20 = vcmask 785920
    %21 = vst.msk [vmem:[#allocation0] sm:$0x1] %vm20, %v19
    %s22 = scalar_lea.vmem [#allocation1], 1
    %v23 = vld [vmem:[%s22] sm:$0x1]
    %24 = vrot.lane.b32.xlu0 %v23, 32
    %v25 = vpop.permute.xlu0 %24
    %vm26 = vcmask 523520
    %27 = vst.msk [vmem:[#allocation0] sm:$0x1] %vm26, %v25
    %s29 = sshll.u32 1, 1
    %s30 = ssub.s32 %s29, 1
    %v32 = vld [vmem:[#allocation0] sm:%s30]
    %s33 = sshll.u32 1, 1
    %s34 = ssub.s32 %s33, 1
    %35 = vst [vmem:[%s1] sm:%s34] %v32

// kernel: tile.8
$region0: #{tile.8}
  #allocation0 [shape = 's32[1]{0}', space=sflag, size = 0x4, scoped, tag = 'scoped memory for tile.8']
  %s0 = inlined_call_operand.vmem [shape: f32[32], index: 0, kind: input, shape index: {}]
  %s1 = inlined_call_operand.vmem [shape: f32[4,32], index: 1, kind: output, shape index: {}]
  // Predicated region
  $region2: #{tile.8} parent=0 // pred_check
    _
  $region3: #{tile.8} parent=0 // pred_check_branch
    %3 = sbr.rel (0) target = $region5
  $region4: #{tile.8} parent=0 // pred_region
    _
  $region5: #{tile.8} parent=0 // pred_fallthru
    _
  %v4 = vld [vmem:[%s0] ss:$0 sm:$0xff]
  %5 = vst [vmem:[%s1] sm:$0xf] %v4

// kernel: swish.1
$region0: #{swish.1}
  #allocation0 [shape = 'u32[]', space=smem, size = 0x4, offset = 0x4, fixed_abs, tag = 'smem constant byte address 0x4 - core index']
  #allocation1 [shape = 'u32[144,128]{1,0:T(1,128)}', space=vmem, size = 0x12000, scoped, tag = 'internal scratch']
  %s0 = inlined_call_operand.vmem [shape: f32[1,128], index: 0, kind: input, shape index: {}]
  %s1 = inlined_call_operand.vmem [shape: f32[2,128], index: 1, kind: input, shape index: {}]
  %s2 = inlined_call_operand.vmem [shape: f32[2,128], index: 2, kind: output, shape index: {}]
  %s3 = sld [smem:[#allocation0]]
  $region48: #{swish.1} parent=0
    _
  %s5 = ssub.s32 1, %s3
  %s6 = scalar_select 0, %s5, %s3
  $region1: #{swish.1} parent=0
    #allocation2 [shape = 'u8[4096]{0}', space=vmem, size = 0x1000, scoped, tag = 'output window, operand 0, single buffered']
    // Predicated region
    $region2: #{swish.1} parent=1 // pred_check
      _
    $region3: #{swish.1} parent=1 // pred_check_branch
      %8 = sbr.rel (0) target = $region5
    $region4: #{swish.1} parent=1 // pred_region
      _
    $region5: #{swish.1} parent=1 // pred_fallthru
      _
    // Predicated region
    $region6: #{swish.1} parent=1 // pred_check
      _
    $region7: #{swish.1} parent=1 // pred_check_branch
      %10 = sbr.rel (0) target = $region9
    $region8: #{swish.1} parent=1 // pred_region
      _
    $region9: #{swish.1} parent=1 // pred_fallthru
      _
    %v11 = vld [vmem:[%s1] sm:$0xff]
    %v12 = vld [vmem:[%s0] sm:$0x1]
    %v14 = vlaneseq
    %v15 = vshrl.u32 %v14, 7
    %v16 = vsub.s32 0, %v15
    %v17 = vrot.slane %v12, %v16
    %v19 = vmul.f32 %v17, %v11
    %v20 = vxor.u32 %v19, 2147483648
    %v21 = vmul.f32 %v20, 1.442695
    %v22 = vpow.pop %v21
    %v23 = vadd.f32 %v22, 1.0
    %v24 = vrcp.pop %v23
    %v25 = vmul.f32 1.0, %v24
    %v26 = vmul.f32 %v11, %v25
    %27 = vst [vmem:[#allocation2] sm:$0xff] %v26
    // Predicated region
    $region10: #{swish.1} parent=1 // pred_check
      _
    $region11: #{swish.1} parent=1 // pred_check_branch
      %29 = sbr.rel (0) target = $region13
    $region12: #{swish.1} parent=1 // pred_region
      // Predicated region
      $region14: #{swish.1} parent=12 // pred_check
        _
      $region15: #{swish.1} parent=12 // pred_check_branch
        %31 = sbr.rel (0) target = $region17
      $region16: #{swish.1} parent=12 // pred_region
        // Predicated region
        $region18: #{swish.1} parent=16 // pred_check
          _
        $region19: #{swish.1} parent=16 // pred_check_branch
          %33 = sbr.rel target = $region21
        $region20: #{swish.1} parent=16 // pred_region
          // Predicated region
          $region33: #{swish.1} parent=20 // pred_check
            _
          $region34: #{swish.1} parent=20 // pred_check_branch
            %49 = sbr.rel (0) target = $region36
          $region35: #{swish.1} parent=20 // pred_region
            %s51 = ssub.s32 4, 1
            loop: start=0, step=1, limit=1
            $region37: #{swish.1} parent=35 // loop_pre_header
              _
            $region38: #{swish.1} parent=35 // loop_header
              %s53 = sphi 0, %s57
              %p54 = scmp.ge.s32.totalorder %s53, 1
              %s58 = sphi [#allocation2], [#allocation2]
              %s59 = sphi %s2, %s2
            $region39: #{swish.1} parent=35 // loop_header_branch
              %56 = sbr.rel (%p54) target = $region43
            $region40: #{swish.1} parent=35 // loop_body
              %v60 = vld [vmem:[%s58] sm:%s51]
              %61 = vst [vmem:[%s59] sm:%s51] %v60
            $region41: #{swish.1} parent=35 // loop_footer
              %s57 = sadd.s32 1, %s53
            $region42: #{swish.1} parent=35 // loop_footer_branch
              %52 = sbr.rel target = $region38
            $region43: #{swish.1} parent=35 // loop_exit
              _
          $region36: #{swish.1} parent=20 // pred_fallthru
            _
        $region21: #{swish.1} parent=16 // pred_fallthru
          _
        // Predicated region
        $region22: #{swish.1} parent=16 // pred_check
          _
        $region23: #{swish.1} parent=16 // pred_check_branch
          %35 = sbr.rel (0) target = $region25
        $region24: #{swish.1} parent=16 // pred_region
          %s37 = ssub.s32 4, 1
          loop: start=0, step=1, limit=1
          $region26: #{swish.1} parent=24 // loop_pre_header
            _
          $region27: #{swish.1} parent=24 // loop_header
            %s39 = sphi 0, %s43
            %p40 = scmp.ge.s32.totalorder %s39, 1
            %s44 = sphi [#allocation2], [#allocation2]
            %s45 = sphi %s2, %s2
          $region28: #{swish.1} parent=24 // loop_header_branch
            %42 = sbr.rel (%p40) target = $region32
          $region29: #{swish.1} parent=24 // loop_body
            %v46 = vld [vmem:[%s44] sm:%s37]
            %47 = vst [vmem:[%s45] sm:%s37] %v46
          $region30: #{swish.1} parent=24 // loop_footer
            %s43 = sadd.s32 1, %s39
          $region31: #{swish.1} parent=24 // loop_footer_branch
            %38 = sbr.rel target = $region27
          $region32: #{swish.1} parent=24 // loop_exit
            _
        $region25: #{swish.1} parent=16 // pred_fallthru
          _
      $region17: #{swish.1} parent=12 // pred_fallthru
        _
      %62 = vnop
    $region13: #{swish.1} parent=1 // pred_fallthru
      _
    // Predicated region
    $region44: #{swish.1} parent=1 // pred_check
      _
    $region45: #{swish.1} parent=1 // pred_check_branch
      %64 = sbr.rel (0) target = $region47
    $region46: #{swish.1} parent=1 // pred_region
      _
    $region47: #{swish.1} parent=1 // pred_fallthru
      _

</llo_original>
